<compile_context>
chip_gen: v7x
topology: tpu7x:2x2x1
jax: 0.10.0
libtpu: 0.0.40
codegen_flags: <defaults>
</compile_context>

<pallas_src>
import jax
import jax.numpy as jnp
from jax.experimental import pallas as pl
from jax.experimental.pallas import tpu as pltpu

HIDDEN = 100       # real hidden width (matches nn.Linear(3, 100))
HIDDEN_PAD = 128   # lane-group padded hidden width


def actor_net_kernel(s_ref, w1_ref, b1_ref, w2_ref, b2_ref, out_ref):
    # s_ref:  (3, TB)   -- batch on lanes
    # w1_ref: (128, 3)  -- torch-layout (out, in), zero-padded rows 100..127
    # b1_ref: (128, 1), w2_ref: (128, 1), b2_ref: (1, 1)
    s = s_ref[...]
    w1 = w1_ref[...]

    # Layer 1 on the VPU: three broadcast-FMAs (128,1)*(1,TB) -> (128,TB).
    h = (w1[:, 0:1] * s[0:1, :]
         + w1[:, 1:2] * s[1:2, :]
         + w1[:, 2:3] * s[2:3, :]
         + b1_ref[...])
    h = jnp.maximum(h, 0.0)

    # Layer 2: elementwise multiply + sublane reduction (XLU) -> (1, TB).
    u = jnp.sum(h * w2_ref[...], axis=0, keepdims=True) + b2_ref[...]
    out_ref[...] = u.astype(out_ref.dtype)


def _round_up(x, m):
    return ((x + m - 1) // m) * m


def actor_net_forward(s, w1, b1, w2, b2, *, block_b=1024):
    """Fused ActorNet forward. s: (B, 3) f32 -> (B, 1) f32."""
    B = s.shape[0]
    H = w1.shape[0]  # 128 (padded hidden)

    # Batch tile: multiple of 128 lanes, capped at block_b.
    tb = min(block_b, _round_up(B, 128))
    bp = _round_up(B, tb)

    # Lane-dense layout: (3, B) with batch on lanes; zero-pad batch to bp.
    s_t = jnp.transpose(s)
    if bp != B:
        s_t = jnp.pad(s_t, ((0, 0), (0, bp - B)))

    flops = 2 * bp * (3 * H + H)
    bytes_accessed = bp * 3 * 4 + bp * 4 + (H * 3 + 2 * H + 1) * 4

    u_t = pl.pallas_call(
        actor_net_kernel,
        out_shape=jax.ShapeDtypeStruct((1, bp), jnp.float32),
        grid=(bp // tb,),
        in_specs=[
            pl.BlockSpec((3, tb), lambda i: (0, i)),   # batch-tiled input
            pl.BlockSpec((H, 3), lambda i: (0, 0)),    # weights: resident
            pl.BlockSpec((H, 1), lambda i: (0, 0)),
            pl.BlockSpec((H, 1), lambda i: (0, 0)),
            pl.BlockSpec((1, 1), lambda i: (0, 0)),
        ],
        out_specs=pl.BlockSpec((1, tb), lambda i: (0, i)),  # lane-dense output
        compiler_params=pltpu.CompilerParams(
            dimension_semantics=("parallel",)),
        cost_estimate=pl.CostEstimate(
            flops=flops, transcendentals=0, bytes_accessed=bytes_accessed),
    )(s_t, w1, b1, w2, b2)

    # Back to the torch-style (B, 1) output.
    return jnp.transpose(u_t[:, :B])


def init_params(key):
    """nn.Linear-default init U(-1/sqrt(fan_in), 1/sqrt(fan_in)), zero-padded
    from hidden=100 to hidden=128 (padding contributes exactly 0 to the output)."""
    k1, k2, k3, k4 = jax.random.split(key, 4)
    bound_fc = 1.0 / jnp.sqrt(3.0)
    bound_mu = 1.0 / jnp.sqrt(float(HIDDEN))
    w1 = jax.random.uniform(k1, (HIDDEN, 3), jnp.float32, -bound_fc, bound_fc)
    b1 = jax.random.uniform(k2, (HIDDEN,), jnp.float32, -bound_fc, bound_fc)
    w2 = jax.random.uniform(k3, (HIDDEN,), jnp.float32, -bound_mu, bound_mu)
    b2 = jax.random.uniform(k4, (1, 1), jnp.float32, -bound_mu, bound_mu)

    pad = HIDDEN_PAD - HIDDEN
    w1 = jnp.pad(w1, ((0, pad), (0, 0)))                   # (128, 3)
    b1 = jnp.pad(b1, (0, pad)).reshape(HIDDEN_PAD, 1)      # (128, 1)
    w2 = jnp.pad(w2, (0, pad)).reshape(HIDDEN_PAD, 1)      # (128, 1)
    return w1, b1, w2, b2


if __name__ == "__main__":
    key = jax.random.PRNGKey(0)
    pkey, skey = jax.random.split(key)
    w1, b1, w2, b2 = init_params(pkey)

    # Small batch of Pendulum-like states (state dim = 3).
    B = 8
    s = jax.random.normal(skey, (B, 3), jnp.float32)

    u = actor_net_forward(s, w1, b1, w2, b2)
    u = jax.block_until_ready(u)

    # Pure-JAX reference of the same math on the unpadded parameters.
    w1_real = w1[:HIDDEN]          # (100, 3) torch layout
    b1_real = b1[:HIDDEN, 0]       # (100,)
    w2_real = w2[:HIDDEN, 0]       # (100,)
    ref = jnp.maximum(s @ w1_real.T + b1_real[None, :], 0.0) @ w2_real[:, None] + b2

    assert u.shape == (B, 1)
    assert jnp.allclose(u, ref, atol=1e-5, rtol=1e-5)

    print("KERNEL_OK")
</pallas_src>

<mosaic_0001>
module attributes {stable_mosaic.version = 11 : i64} {
  func.func @actor_net_kernel(%arg0: i32, %arg1: memref<3x128xf32, #tpu.memory_space<vmem>>, %arg2: memref<128x3xf32, #tpu.memory_space<vmem>>, %arg3: memref<128x1xf32, #tpu.memory_space<vmem>>, %arg4: memref<128x1xf32, #tpu.memory_space<vmem>>, %arg5: memref<1x1xf32, #tpu.memory_space<vmem>>, %arg6: memref<1x128xf32, #tpu.memory_space<vmem>>) attributes {dimension_semantics = [#tpu.dimension_semantics<parallel>], iteration_bounds = array<i64: 1>, scalar_prefetch = 0 : i64, scratch_operands = 0 : i64, tpu.core_type = #tpu.core_type<tc>, window_params = [{transform_indices = @transform_0, window_bounds = array<i64: 3, 128>}, {pipeline_mode = #tpu.pipeline_mode<synchronous>, transform_indices = @transform_1, window_bounds = array<i64: 128, 3>}, {pipeline_mode = #tpu.pipeline_mode<synchronous>, transform_indices = @transform_2, window_bounds = array<i64: 128, 1>}, {pipeline_mode = #tpu.pipeline_mode<synchronous>, transform_indices = @transform_3, window_bounds = array<i64: 128, 1>}, {pipeline_mode = #tpu.pipeline_mode<synchronous>, transform_indices = @transform_4, window_bounds = array<i64: 1, 1>}, {transform_indices = @transform_5, window_bounds = array<i64: 1, 128>}]} {
    %c0 = arith.constant 0 : index
    %c0_0 = arith.constant 0 : index
    %0 = vector.load %arg1[%c0, %c0_0] : memref<3x128xf32, #tpu.memory_space<vmem>>, vector<3x128xf32>
    %c0_1 = arith.constant 0 : index
    %c0_2 = arith.constant 0 : index
    %1 = vector.load %arg2[%c0_1, %c0_2] : memref<128x3xf32, #tpu.memory_space<vmem>>, vector<128x3xf32>
    %2 = vector.extract_strided_slice %1 {offsets = [0, 0], sizes = [128, 1], strides = [1, 1]} : vector<128x3xf32> to vector<128x1xf32>
    %3 = vector.extract_strided_slice %0 {offsets = [0, 0], sizes = [1, 128], strides = [1, 1]} : vector<3x128xf32> to vector<1x128xf32>
    %4 = vector.broadcast %2 : vector<128x1xf32> to vector<128x128xf32>
    %5 = vector.broadcast %3 : vector<1x128xf32> to vector<128x128xf32>
    %6 = arith.mulf %4, %5 : vector<128x128xf32>
    %7 = vector.extract_strided_slice %1 {offsets = [0, 1], sizes = [128, 1], strides = [1, 1]} : vector<128x3xf32> to vector<128x1xf32>
    %8 = vector.extract_strided_slice %0 {offsets = [1, 0], sizes = [1, 128], strides = [1, 1]} : vector<3x128xf32> to vector<1x128xf32>
    %9 = vector.broadcast %7 : vector<128x1xf32> to vector<128x128xf32>
    %10 = vector.broadcast %8 : vector<1x128xf32> to vector<128x128xf32>
    %11 = arith.mulf %9, %10 : vector<128x128xf32>
    %12 = arith.addf %6, %11 : vector<128x128xf32>
    %13 = vector.extract_strided_slice %1 {offsets = [0, 2], sizes = [128, 1], strides = [1, 1]} : vector<128x3xf32> to vector<128x1xf32>
    %14 = vector.extract_strided_slice %0 {offsets = [2, 0], sizes = [1, 128], strides = [1, 1]} : vector<3x128xf32> to vector<1x128xf32>
    %15 = vector.broadcast %13 : vector<128x1xf32> to vector<128x128xf32>
    %16 = vector.broadcast %14 : vector<1x128xf32> to vector<128x128xf32>
    %17 = arith.mulf %15, %16 : vector<128x128xf32>
    %18 = arith.addf %12, %17 : vector<128x128xf32>
    %c0_3 = arith.constant 0 : index
    %c0_4 = arith.constant 0 : index
    %19 = vector.load %arg3[%c0_3, %c0_4] : memref<128x1xf32, #tpu.memory_space<vmem>>, vector<128x1xf32>
    %20 = vector.broadcast %19 : vector<128x1xf32> to vector<128x128xf32>
    %21 = arith.addf %18, %20 : vector<128x128xf32>
    %cst = arith.constant 0.000000e+00 : f32
    %22 = vector.broadcast %cst : f32 to vector<128x128xf32>
    %23 = arith.maximumf %21, %22 : vector<128x128xf32>
    %c0_5 = arith.constant 0 : index
    %c0_6 = arith.constant 0 : index
    %24 = vector.load %arg4[%c0_5, %c0_6] : memref<128x1xf32, #tpu.memory_space<vmem>>, vector<128x1xf32>
    %25 = vector.broadcast %24 : vector<128x1xf32> to vector<128x128xf32>
    %26 = arith.mulf %23, %25 : vector<128x128xf32>
    %cst_7 = arith.constant dense<0.000000e+00> : vector<128xf32>
    %27 = vector.multi_reduction <add>, %26, %cst_7 [0] : vector<128x128xf32> to vector<128xf32>
    %28 = vector.shape_cast %27 : vector<128xf32> to vector<1x128xf32>
    %c0_8 = arith.constant 0 : index
    %c0_9 = arith.constant 0 : index
    %29 = vector.load %arg5[%c0_8, %c0_9] : memref<1x1xf32, #tpu.memory_space<vmem>>, vector<1x1xf32>
    %30 = vector.broadcast %29 : vector<1x1xf32> to vector<1x128xf32>
    %31 = arith.addf %28, %30 : vector<1x128xf32>
    %c0_10 = arith.constant 0 : index
    %c0_11 = arith.constant 0 : index
    %32 = vector.load %arg6[%c0_10, %c0_11] : memref<1x128xf32, #tpu.memory_space<vmem>>, vector<1x128xf32>
    tpu.vector_store %arg6[%c0_10, %c0_11], %31 {strides = array<i32>} : memref<1x128xf32, #tpu.memory_space<vmem>>, vector<1x128xf32>,
    return
  }
  func.func @transform_0(%arg0: i32) -> (i32, i32) {
    %c0_i32 = arith.constant 0 : i32
    %c0_i32_0 = arith.constant 0 : i32
    return %c0_i32, %arg0 : i32, i32
  }
  func.func @transform_1(%arg0: i32) -> (i32, i32) {
    %c0_i32 = arith.constant 0 : i32
    %c0_i32_0 = arith.constant 0 : i32
    %c0_i32_1 = arith.constant 0 : i32
    return %c0_i32, %c0_i32_0 : i32, i32
  }
  func.func @transform_2(%arg0: i32) -> (i32, i32) {
    %c0_i32 = arith.constant 0 : i32
    %c0_i32_0 = arith.constant 0 : i32
    %c0_i32_1 = arith.constant 0 : i32
    return %c0_i32, %c0_i32_0 : i32, i32
  }
  func.func @transform_3(%arg0: i32) -> (i32, i32) {
    %c0_i32 = arith.constant 0 : i32
    %c0_i32_0 = arith.constant 0 : i32
    %c0_i32_1 = arith.constant 0 : i32
    return %c0_i32, %c0_i32_0 : i32, i32
  }
  func.func @transform_4(%arg0: i32) -> (i32, i32) {
    %c0_i32 = arith.constant 0 : i32
    %c0_i32_0 = arith.constant 0 : i32
    %c0_i32_1 = arith.constant 0 : i32
    return %c0_i32, %c0_i32_0 : i32, i32
  }
  func.func @transform_5(%arg0: i32) -> (i32, i32) {
    %c0_i32 = arith.constant 0 : i32
    %c0_i32_0 = arith.constant 0 : i32
    return %c0_i32, %arg0 : i32, i32
  }
}

</mosaic_0001>

<llo_original>
// kernel: tpu_custom_call.1
$region0: #{tpu_custom_call.1}
  #allocation0 [shape = 'u32[]', space=smem, size = 0x4, offset = 0x4, fixed_abs, tag = 'smem constant byte address 0x4 - core index']
  #allocation1 [shape = 'u32[144,128]{1,0:T(1,128)}', space=vmem, size = 0x12000, scoped, tag = 'internal scratch']
  #allocation2 [shape = 'f32[1,1]{1,0:T(1,128)S(1)}', space=vmem, size = 0x200, scoped, tag = 'scoped memory for tpu_custom_call.1']
  %s0 = inlined_call_operand.vmem [shape: f32[3,128], index: 0, kind: input, shape index: {}]
  %s1 = inlined_call_operand.vmem [shape: f32[128,3], index: 1, kind: input, shape index: {}]
  %s2 = inlined_call_operand.vmem [shape: f32[128,1], index: 2, kind: input, shape index: {}]
  %s3 = inlined_call_operand.vmem [shape: f32[128,1], index: 3, kind: input, shape index: {}]
  %s4 = inlined_call_operand.<no memory space> [shape: f32[1,1], index: 4, kind: input, shape index: {}]
  %s5 = inlined_call_operand.hbm [shape: f32[1,128], index: 5, kind: output, shape index: {}]
  %s6 = sld [smem:[#allocation0]]
  $region30: #{tpu_custom_call.1} parent=0
    _
  %s8 = ssub.s32 1, %s6
  %s9 = scalar_select 0, %s8, %s6
  %v10 = vstv %s4
  %11 = vst [vmem:[#allocation2] sm:$0x1] %v10
  $region1: #{tpu_custom_call.1} parent=0
    #allocation3 [shape = 'u8[512]{0}', space=vmem, size = 0x400, scoped, tag = 'output window, operand 0, single buffered']
    #allocation4 [shape = 's32[1]{0}', space=sflag, size = 0x4, scoped, tag = 'scoped memory for tpu_custom_call.1']
    %12 = vsyncpa [#allocation4], 0
    // Predicated region
    $region2: #{tpu_custom_call.1} parent=1 // pred_check
      _
    $region3: #{tpu_custom_call.1} parent=1 // pred_check_branch
      %14 = sbr.rel (0) target = $region5
    $region4: #{tpu_custom_call.1} parent=1 // pred_region
      _
    $region5: #{tpu_custom_call.1} parent=1 // pred_fallthru
      _
    // Predicated region
    $region6: #{tpu_custom_call.1} parent=1 // pred_check
      _
    $region7: #{tpu_custom_call.1} parent=1 // pred_check_branch
      %16 = sbr.rel (0) target = $region9
    $region8: #{tpu_custom_call.1} parent=1 // pred_region
      _
    $region9: #{tpu_custom_call.1} parent=1 // pred_fallthru
      _
    // Predicated region
    $region10: #{tpu_custom_call.1} parent=1 // pred_check
      _
    $region11: #{tpu_custom_call.1} parent=1 // pred_check_branch
      %18 = sbr.rel (0) target = $region13
    $region12: #{tpu_custom_call.1} parent=1 // pred_region
      _
    $region13: #{tpu_custom_call.1} parent=1 // pred_fallthru
      _
    // Predicated region
    $region14: #{tpu_custom_call.1} parent=1 // pred_check
      _
    $region15: #{tpu_custom_call.1} parent=1 // pred_check_branch
      %20 = sbr.rel (0) target = $region17
    $region16: #{tpu_custom_call.1} parent=1 // pred_region
      _
    $region17: #{tpu_custom_call.1} parent=1 // pred_fallthru
      _
    // Predicated region
    $region18: #{tpu_custom_call.1} parent=1 // pred_check
      _
    $region19: #{tpu_custom_call.1} parent=1 // pred_check_branch
      %22 = sbr.rel (0) target = $region21
    $region20: #{tpu_custom_call.1} parent=1 // pred_region
      _
    $region21: #{tpu_custom_call.1} parent=1 // pred_fallthru
      _
    %v23 = vld [vmem:[%s0] sm:$0x7]
    %v24 = vld [vmem:[%s1] sm:$0xff]
    %v25 = vld [vmem:[%s1 + $0x8] sm:$0xff]
    %v26 = vld [vmem:[%s1 + $0x10] sm:$0xff]
    %v27 = vld [vmem:[%s1 + $0x18] sm:$0xff]
    %v28 = vld [vmem:[%s1 + $0x20] sm:$0xff]
    %v29 = vld [vmem:[%s1 + $0x28] sm:$0xff]
    %v30 = vld [vmem:[%s1 + $0x30] sm:$0xff]
    %v31 = vld [vmem:[%s1 + $0x38] sm:$0xff]
    %v32 = vld [vmem:[%s1 + $0x40] sm:$0xff]
    %v33 = vld [vmem:[%s1 + $0x48] sm:$0xff]
    %v34 = vld [vmem:[%s1 + $0x50] sm:$0xff]
    %v35 = vld [vmem:[%s1 + $0x58] sm:$0xff]
    %v36 = vld [vmem:[%s1 + $0x60] sm:$0xff]
    %v37 = vld [vmem:[%s1 + $0x68] sm:$0xff]
    %v38 = vld [vmem:[%s1 + $0x70] sm:$0xff]
    %v39 = vld [vmem:[%s1 + $0x78] sm:$0xff]
    %41 = vset.pattern.permute.xlu0 0
    %42 = vperm.xlu0 %41, %v24
    %v43 = vpop.permute.xlu0 %42
    %46 = vset.pattern.permute.xlu0 0
    %47 = vperm.xlu0 %46, %v25
    %v48 = vpop.permute.xlu0 %47
    %51 = vset.pattern.permute.xlu0 0
    %52 = vperm.xlu0 %51, %v26
    %v53 = vpop.permute.xlu0 %52
    %56 = vset.pattern.permute.xlu0 0
    %57 = vperm.xlu0 %56, %v27
    %v58 = vpop.permute.xlu0 %57
    %61 = vset.pattern.permute.xlu0 0
    %62 = vperm.xlu0 %61, %v28
    %v63 = vpop.permute.xlu0 %62
    %66 = vset.pattern.permute.xlu0 0
    %67 = vperm.xlu0 %66, %v29
    %v68 = vpop.permute.xlu0 %67
    %71 = vset.pattern.permute.xlu0 0
    %72 = vperm.xlu0 %71, %v30
    %v73 = vpop.permute.xlu0 %72
    %76 = vset.pattern.permute.xlu0 0
    %77 = vperm.xlu0 %76, %v31
    %v78 = vpop.permute.xlu0 %77
    %81 = vset.pattern.permute.xlu0 0
    %82 = vperm.xlu0 %81, %v32
    %v83 = vpop.permute.xlu0 %82
    %86 = vset.pattern.permute.xlu0 0
    %87 = vperm.xlu0 %86, %v33
    %v88 = vpop.permute.xlu0 %87
    %91 = vset.pattern.permute.xlu0 0
    %92 = vperm.xlu0 %91, %v34
    %v93 = vpop.permute.xlu0 %92
    %96 = vset.pattern.permute.xlu0 0
    %97 = vperm.xlu0 %96, %v35
    %v98 = vpop.permute.xlu0 %97
    %101 = vset.pattern.permute.xlu0 0
    %102 = vperm.xlu0 %101, %v36
    %v103 = vpop.permute.xlu0 %102
    %106 = vset.pattern.permute.xlu0 0
    %107 = vperm.xlu0 %106, %v37
    %v108 = vpop.permute.xlu0 %107
    %111 = vset.pattern.permute.xlu0 0
    %112 = vperm.xlu0 %111, %v38
    %v113 = vpop.permute.xlu0 %112
    %116 = vset.pattern.permute.xlu0 0
    %117 = vperm.xlu0 %116, %v39
    %v118 = vpop.permute.xlu0 %117
    %v120 = vlaneseq
    %v121 = vshrl.u32 %v120, 7
    %v122 = vsub.s32 0, %v121
    %v123 = vrot.slane %v23, %v122
    %v124 = vmul.f32 %v43, %v123
    %v125 = vmul.f32 %v48, %v123
    %v126 = vmul.f32 %v53, %v123
    %v127 = vmul.f32 %v58, %v123
    %v128 = vmul.f32 %v63, %v123
    %v129 = vmul.f32 %v68, %v123
    %v130 = vmul.f32 %v73, %v123
    %v131 = vmul.f32 %v78, %v123
    %v132 = vmul.f32 %v83, %v123
    %v133 = vmul.f32 %v88, %v123
    %v134 = vmul.f32 %v93, %v123
    %v135 = vmul.f32 %v98, %v123
    %v136 = vmul.f32 %v103, %v123
    %v137 = vmul.f32 %v108, %v123
    %v138 = vmul.f32 %v113, %v123
    %v139 = vmul.f32 %v118, %v123
    %140 = vset.pattern.permute.xlu0 1
    %141 = vperm.xlu0 %140, %v24
    %v142 = vpop.permute.xlu0 %141
    %144 = vset.pattern.permute.xlu0 1
    %145 = vperm.xlu0 %144, %v25
    %v146 = vpop.permute.xlu0 %145
    %148 = vset.pattern.permute.xlu0 1
    %149 = vperm.xlu0 %148, %v26
    %v150 = vpop.permute.xlu0 %149
    %152 = vset.pattern.permute.xlu0 1
    %153 = vperm.xlu0 %152, %v27
    %v154 = vpop.permute.xlu0 %153
    %156 = vset.pattern.permute.xlu0 1
    %157 = vperm.xlu0 %156, %v28
    %v158 = vpop.permute.xlu0 %157
    %160 = vset.pattern.permute.xlu0 1
    %161 = vperm.xlu0 %160, %v29
    %v162 = vpop.permute.xlu0 %161
    %164 = vset.pattern.permute.xlu0 1
    %165 = vperm.xlu0 %164, %v30
    %v166 = vpop.permute.xlu0 %165
    %168 = vset.pattern.permute.xlu0 1
    %169 = vperm.xlu0 %168, %v31
    %v170 = vpop.permute.xlu0 %169
    %172 = vset.pattern.permute.xlu0 1
    %173 = vperm.xlu0 %172, %v32
    %v174 = vpop.permute.xlu0 %173
    %176 = vset.pattern.permute.xlu0 1
    %177 = vperm.xlu0 %176, %v33
    %v178 = vpop.permute.xlu0 %177
    %180 = vset.pattern.permute.xlu0 1
    %181 = vperm.xlu0 %180, %v34
    %v182 = vpop.permute.xlu0 %181
    %184 = vset.pattern.permute.xlu0 1
    %185 = vperm.xlu0 %184, %v35
    %v186 = vpop.permute.xlu0 %185
    %188 = vset.pattern.permute.xlu0 1
    %189 = vperm.xlu0 %188, %v36
    %v190 = vpop.permute.xlu0 %189
    %192 = vset.pattern.permute.xlu0 1
    %193 = vperm.xlu0 %192, %v37
    %v194 = vpop.permute.xlu0 %193
    %196 = vset.pattern.permute.xlu0 1
    %197 = vperm.xlu0 %196, %v38
    %v198 = vpop.permute.xlu0 %197
    %200 = vset.pattern.permute.xlu0 1
    %201 = vperm.xlu0 %200, %v39
    %v202 = vpop.permute.xlu0 %201
    %v204 = vlaneseq
    %v205 = vshrl.u32 %v204, 7
    %v206 = vsub.s32 1, %v205
    %v207 = vrot.slane %v23, %v206
    %v208 = vmul.f32 %v142, %v207
    %v209 = vmul.f32 %v146, %v207
    %v210 = vmul.f32 %v150, %v207
    %v211 = vmul.f32 %v154, %v207
    %v212 = vmul.f32 %v158, %v207
    %v213 = vmul.f32 %v162, %v207
    %v214 = vmul.f32 %v166, %v207
    %v215 = vmul.f32 %v170, %v207
    %v216 = vmul.f32 %v174, %v207
    %v217 = vmul.f32 %v178, %v207
    %v218 = vmul.f32 %v182, %v207
    %v219 = vmul.f32 %v186, %v207
    %v220 = vmul.f32 %v190, %v207
    %v221 = vmul.f32 %v194, %v207
    %v222 = vmul.f32 %v198, %v207
    %v223 = vmul.f32 %v202, %v207
    %v224 = vadd.f32 %v124, %v208
    %v225 = vadd.f32 %v125, %v209
    %v226 = vadd.f32 %v126, %v210
    %v227 = vadd.f32 %v127, %v211
    %v228 = vadd.f32 %v128, %v212
    %v229 = vadd.f32 %v129, %v213
    %v230 = vadd.f32 %v130, %v214
    %v231 = vadd.f32 %v131, %v215
    %v232 = vadd.f32 %v132, %v216
    %v233 = vadd.f32 %v133, %v217
    %v234 = vadd.f32 %v134, %v218
    %v235 = vadd.f32 %v135, %v219
    %v236 = vadd.f32 %v136, %v220
    %v237 = vadd.f32 %v137, %v221
    %v238 = vadd.f32 %v138, %v222
    %v239 = vadd.f32 %v139, %v223
    %240 = vset.pattern.permute.xlu0 2
    %241 = vperm.xlu0 %240, %v24
    %v242 = vpop.permute.xlu0 %241
    %244 = vset.pattern.permute.xlu0 2
    %245 = vperm.xlu0 %244, %v25
    %v246 = vpop.permute.xlu0 %245
    %248 = vset.pattern.permute.xlu0 2
    %249 = vperm.xlu0 %248, %v26
    %v250 = vpop.permute.xlu0 %249
    %252 = vset.pattern.permute.xlu0 2
    %253 = vperm.xlu0 %252, %v27
    %v254 = vpop.permute.xlu0 %253
    %256 = vset.pattern.permute.xlu0 2
    %257 = vperm.xlu0 %256, %v28
    %v258 = vpop.permute.xlu0 %257
    %260 = vset.pattern.permute.xlu0 2
    %261 = vperm.xlu0 %260, %v29
    %v262 = vpop.permute.xlu0 %261
    %264 = vset.pattern.permute.xlu0 2
    %265 = vperm.xlu0 %264, %v30
    %v266 = vpop.permute.xlu0 %265
    %268 = vset.pattern.permute.xlu0 2
    %269 = vperm.xlu0 %268, %v31
    %v270 = vpop.permute.xlu0 %269
    %272 = vset.pattern.permute.xlu0 2
    %273 = vperm.xlu0 %272, %v32
    %v274 = vpop.permute.xlu0 %273
    %276 = vset.pattern.permute.xlu0 2
    %277 = vperm.xlu0 %276, %v33
    %v278 = vpop.permute.xlu0 %277
    %280 = vset.pattern.permute.xlu0 2
    %281 = vperm.xlu0 %280, %v34
    %v282 = vpop.permute.xlu0 %281
    %284 = vset.pattern.permute.xlu0 2
    %285 = vperm.xlu0 %284, %v35
    %v286 = vpop.permute.xlu0 %285
    %288 = vset.pattern.permute.xlu0 2
    %289 = vperm.xlu0 %288, %v36
    %v290 = vpop.permute.xlu0 %289
    %292 = vset.pattern.permute.xlu0 2
    %293 = vperm.xlu0 %292, %v37
    %v294 = vpop.permute.xlu0 %293
    %296 = vset.pattern.permute.xlu0 2
    %297 = vperm.xlu0 %296, %v38
    %v298 = vpop.permute.xlu0 %297
    %300 = vset.pattern.permute.xlu0 2
    %301 = vperm.xlu0 %300, %v39
    %v302 = vpop.permute.xlu0 %301
    %v304 = vlaneseq
    %v305 = vshrl.u32 %v304, 7
    %v306 = vsub.s32 2, %v305
    %v307 = vrot.slane %v23, %v306
    %v308 = vmul.f32 %v242, %v307
    %v309 = vmul.f32 %v246, %v307
    %v310 = vmul.f32 %v250, %v307
    %v311 = vmul.f32 %v254, %v307
    %v312 = vmul.f32 %v258, %v307
    %v313 = vmul.f32 %v262, %v307
    %v314 = vmul.f32 %v266, %v307
    %v315 = vmul.f32 %v270, %v307
    %v316 = vmul.f32 %v274, %v307
    %v317 = vmul.f32 %v278, %v307
    %v318 = vmul.f32 %v282, %v307
    %v319 = vmul.f32 %v286, %v307
    %v320 = vmul.f32 %v290, %v307
    %v321 = vmul.f32 %v294, %v307
    %v322 = vmul.f32 %v298, %v307
    %v323 = vmul.f32 %v302, %v307
    %v324 = vadd.f32 %v224, %v308
    %v325 = vadd.f32 %v225, %v309
    %v326 = vadd.f32 %v226, %v310
    %v327 = vadd.f32 %v227, %v311
    %v328 = vadd.f32 %v228, %v312
    %v329 = vadd.f32 %v229, %v313
    %v330 = vadd.f32 %v230, %v314
    %v331 = vadd.f32 %v231, %v315
    %v332 = vadd.f32 %v232, %v316
    %v333 = vadd.f32 %v233, %v317
    %v334 = vadd.f32 %v234, %v318
    %v335 = vadd.f32 %v235, %v319
    %v336 = vadd.f32 %v236, %v320
    %v337 = vadd.f32 %v237, %v321
    %v338 = vadd.f32 %v238, %v322
    %v339 = vadd.f32 %v239, %v323
    %v340 = vld [vmem:[%s2] sm:$0xff]
    %v341 = vld [vmem:[%s2 + $0x8] sm:$0xff]
    %v342 = vld [vmem:[%s2 + $0x10] sm:$0xff]
    %v343 = vld [vmem:[%s2 + $0x18] sm:$0xff]
    %v344 = vld [vmem:[%s2 + $0x20] sm:$0xff]
    %v345 = vld [vmem:[%s2 + $0x28] sm:$0xff]
    %v346 = vld [vmem:[%s2 + $0x30] sm:$0xff]
    %v347 = vld [vmem:[%s2 + $0x38] sm:$0xff]
    %v348 = vld [vmem:[%s2 + $0x40] sm:$0xff]
    %v349 = vld [vmem:[%s2 + $0x48] sm:$0xff]
    %v350 = vld [vmem:[%s2 + $0x50] sm:$0xff]
    %v351 = vld [vmem:[%s2 + $0x58] sm:$0xff]
    %v352 = vld [vmem:[%s2 + $0x60] sm:$0xff]
    %v353 = vld [vmem:[%s2 + $0x68] sm:$0xff]
    %v354 = vld [vmem:[%s2 + $0x70] sm:$0xff]
    %v355 = vld [vmem:[%s2 + $0x78] sm:$0xff]
    %357 = vset.pattern.permute.xlu0 0
    %358 = vperm.xlu0 %357, %v340
    %v359 = vpop.permute.xlu0 %358
    %362 = vset.pattern.permute.xlu0 0
    %363 = vperm.xlu0 %362, %v341
    %v364 = vpop.permute.xlu0 %363
    %367 = vset.pattern.permute.xlu0 0
    %368 = vperm.xlu0 %367, %v342
    %v369 = vpop.permute.xlu0 %368
    %372 = vset.pattern.permute.xlu0 0
    %373 = vperm.xlu0 %372, %v343
    %v374 = vpop.permute.xlu0 %373
    %377 = vset.pattern.permute.xlu0 0
    %378 = vperm.xlu0 %377, %v344
    %v379 = vpop.permute.xlu0 %378
    %382 = vset.pattern.permute.xlu0 0
    %383 = vperm.xlu0 %382, %v345
    %v384 = vpop.permute.xlu0 %383
    %387 = vset.pattern.permute.xlu0 0
    %388 = vperm.xlu0 %387, %v346
    %v389 = vpop.permute.xlu0 %388
    %392 = vset.pattern.permute.xlu0 0
    %393 = vperm.xlu0 %392, %v347
    %v394 = vpop.permute.xlu0 %393
    %397 = vset.pattern.permute.xlu0 0
    %398 = vperm.xlu0 %397, %v348
    %v399 = vpop.permute.xlu0 %398
    %402 = vset.pattern.permute.xlu0 0
    %403 = vperm.xlu0 %402, %v349
    %v404 = vpop.permute.xlu0 %403
    %407 = vset.pattern.permute.xlu0 0
    %408 = vperm.xlu0 %407, %v350
    %v409 = vpop.permute.xlu0 %408
    %412 = vset.pattern.permute.xlu0 0
    %413 = vperm.xlu0 %412, %v351
    %v414 = vpop.permute.xlu0 %413
    %417 = vset.pattern.permute.xlu0 0
    %418 = vperm.xlu0 %417, %v352
    %v419 = vpop.permute.xlu0 %418
    %422 = vset.pattern.permute.xlu0 0
    %423 = vperm.xlu0 %422, %v353
    %v424 = vpop.permute.xlu0 %423
    %427 = vset.pattern.permute.xlu0 0
    %428 = vperm.xlu0 %427, %v354
    %v429 = vpop.permute.xlu0 %428
    %432 = vset.pattern.permute.xlu0 0
    %433 = vperm.xlu0 %432, %v355
    %v434 = vpop.permute.xlu0 %433
    %v436 = vadd.f32 %v324, %v359
    %v437 = vadd.f32 %v325, %v364
    %v438 = vadd.f32 %v326, %v369
    %v439 = vadd.f32 %v327, %v374
    %v440 = vadd.f32 %v328, %v379
    %v441 = vadd.f32 %v329, %v384
    %v442 = vadd.f32 %v330, %v389
    %v443 = vadd.f32 %v331, %v394
    %v444 = vadd.f32 %v332, %v399
    %v445 = vadd.f32 %v333, %v404
    %v446 = vadd.f32 %v334, %v409
    %v447 = vadd.f32 %v335, %v414
    %v448 = vadd.f32 %v336, %v419
    %v449 = vadd.f32 %v337, %v424
    %v450 = vadd.f32 %v338, %v429
    %v451 = vadd.f32 %v339, %v434
    %v452 = vmax.f32 %v436, 0.0
    %v453 = vmax.f32 %v437, 0.0
    %v454 = vmax.f32 %v438, 0.0
    %v455 = vmax.f32 %v439, 0.0
    %v456 = vmax.f32 %v440, 0.0
    %v457 = vmax.f32 %v441, 0.0
    %v458 = vmax.f32 %v442, 0.0
    %v459 = vmax.f32 %v443, 0.0
    %v460 = vmax.f32 %v444, 0.0
    %v461 = vmax.f32 %v445, 0.0
    %v462 = vmax.f32 %v446, 0.0
    %v463 = vmax.f32 %v447, 0.0
    %v464 = vmax.f32 %v448, 0.0
    %v465 = vmax.f32 %v449, 0.0
    %v466 = vmax.f32 %v450, 0.0
    %v467 = vmax.f32 %v451, 0.0
    %v468 = vld [vmem:[%s3] sm:$0xff]
    %v469 = vld [vmem:[%s3 + $0x8] sm:$0xff]
    %v470 = vld [vmem:[%s3 + $0x10] sm:$0xff]
    %v471 = vld [vmem:[%s3 + $0x18] sm:$0xff]
    %v472 = vld [vmem:[%s3 + $0x20] sm:$0xff]
    %v473 = vld [vmem:[%s3 + $0x28] sm:$0xff]
    %v474 = vld [vmem:[%s3 + $0x30] sm:$0xff]
    %v475 = vld [vmem:[%s3 + $0x38] sm:$0xff]
    %v476 = vld [vmem:[%s3 + $0x40] sm:$0xff]
    %v477 = vld [vmem:[%s3 + $0x48] sm:$0xff]
    %v478 = vld [vmem:[%s3 + $0x50] sm:$0xff]
    %v479 = vld [vmem:[%s3 + $0x58] sm:$0xff]
    %v480 = vld [vmem:[%s3 + $0x60] sm:$0xff]
    %v481 = vld [vmem:[%s3 + $0x68] sm:$0xff]
    %v482 = vld [vmem:[%s3 + $0x70] sm:$0xff]
    %v483 = vld [vmem:[%s3 + $0x78] sm:$0xff]
    %485 = vset.pattern.permute.xlu0 0
    %486 = vperm.xlu0 %485, %v468
    %v487 = vpop.permute.xlu0 %486
    %490 = vset.pattern.permute.xlu0 0
    %491 = vperm.xlu0 %490, %v469
    %v492 = vpop.permute.xlu0 %491
    %495 = vset.pattern.permute.xlu0 0
    %496 = vperm.xlu0 %495, %v470
    %v497 = vpop.permute.xlu0 %496
    %500 = vset.pattern.permute.xlu0 0
    %501 = vperm.xlu0 %500, %v471
    %v502 = vpop.permute.xlu0 %501
    %505 = vset.pattern.permute.xlu0 0
    %506 = vperm.xlu0 %505, %v472
    %v507 = vpop.permute.xlu0 %506
    %510 = vset.pattern.permute.xlu0 0
    %511 = vperm.xlu0 %510, %v473
    %v512 = vpop.permute.xlu0 %511
    %515 = vset.pattern.permute.xlu0 0
    %516 = vperm.xlu0 %515, %v474
    %v517 = vpop.permute.xlu0 %516
    %520 = vset.pattern.permute.xlu0 0
    %521 = vperm.xlu0 %520, %v475
    %v522 = vpop.permute.xlu0 %521
    %525 = vset.pattern.permute.xlu0 0
    %526 = vperm.xlu0 %525, %v476
    %v527 = vpop.permute.xlu0 %526
    %530 = vset.pattern.permute.xlu0 0
    %531 = vperm.xlu0 %530, %v477
    %v532 = vpop.permute.xlu0 %531
    %535 = vset.pattern.permute.xlu0 0
    %536 = vperm.xlu0 %535, %v478
    %v537 = vpop.permute.xlu0 %536
    %540 = vset.pattern.permute.xlu0 0
    %541 = vperm.xlu0 %540, %v479
    %v542 = vpop.permute.xlu0 %541
    %545 = vset.pattern.permute.xlu0 0
    %546 = vperm.xlu0 %545, %v480
    %v547 = vpop.permute.xlu0 %546
    %550 = vset.pattern.permute.xlu0 0
    %551 = vperm.xlu0 %550, %v481
    %v552 = vpop.permute.xlu0 %551
    %555 = vset.pattern.permute.xlu0 0
    %556 = vperm.xlu0 %555, %v482
    %v557 = vpop.permute.xlu0 %556
    %560 = vset.pattern.permute.xlu0 0
    %561 = vperm.xlu0 %560, %v483
    %v562 = vpop.permute.xlu0 %561
    %v564 = vmul.f32 %v452, %v487
    %v565 = vmul.f32 %v453, %v492
    %v566 = vmul.f32 %v454, %v497
    %v567 = vmul.f32 %v455, %v502
    %v568 = vmul.f32 %v456, %v507
    %v569 = vmul.f32 %v457, %v512
    %v570 = vmul.f32 %v458, %v517
    %v571 = vmul.f32 %v459, %v522
    %v572 = vmul.f32 %v460, %v527
    %v573 = vmul.f32 %v461, %v532
    %v574 = vmul.f32 %v462, %v537
    %v575 = vmul.f32 %v463, %v542
    %v576 = vmul.f32 %v464, %v547
    %v577 = vmul.f32 %v465, %v552
    %v578 = vmul.f32 %v466, %v557
    %v579 = vmul.f32 %v467, %v562
    %v580 = vadd.f32 %v564, %v565
    %v581 = vadd.f32 %v580, %v566
    %v582 = vadd.f32 %v581, %v567
    %v583 = vadd.f32 %v582, %v568
    %v584 = vadd.f32 %v583, %v569
    %v585 = vadd.f32 %v584, %v570
    %v586 = vadd.f32 %v585, %v571
    %v587 = vadd.f32 %v586, %v572
    %v588 = vadd.f32 %v587, %v573
    %v589 = vadd.f32 %v588, %v574
    %v590 = vadd.f32 %v589, %v575
    %v591 = vadd.f32 %v590, %v576
    %v592 = vadd.f32 %v591, %v577
    %v593 = vadd.f32 %v592, %v578
    %v594 = vadd.f32 %v593, %v579
    %v595 = vrot.slane %v594, 4
    %v596 = vadd.f32 %v594, %v595
    %v597 = vrot.slane %v596, 2
    %v598 = vadd.f32 %v596, %v597
    %v599 = vrot.slane %v598, 1
    %v600 = vadd.f32 %v598, %v599
    %v601 = vld [vmem:[#allocation2] sm:$0x1]
    %603 = vset.pattern.permute.xlu0 0
    %604 = vperm.xlu0 %603, %v601
    %v605 = vpop.permute.xlu0 %604
    %v607 = vlaneseq
    %v608 = vshrl.u32 %v607, 7
    %v609 = vsub.s32 0, %v608
    %v610 = vrot.slane %v605, %v609
    %v611 = vadd.f32 %v600, %v610
    %612 = vst [vmem:[#allocation3] sm:$0x1] %v611
    // Predicated region
    $region22: #{tpu_custom_call.1} parent=1 // pred_check
      _
    $region23: #{tpu_custom_call.1} parent=1 // pred_check_branch
      %614 = sbr.rel (0) target = $region25
    $region24: #{tpu_custom_call.1} parent=1 // pred_region
      %s616 = ssub.s32 16, 16
      %617 = vsyncadd [#allocation4], %s616
      %s619 = sshll.u32 [#allocation3], 4
      %s620 = int_to_ptr.vmem [resolvable:$true] %s619
      %622 = dma.vmem_to_hbm [thread:$0]  %s620, 16, %s5, [#allocation4]
    $region25: #{tpu_custom_call.1} parent=1 // pred_fallthru
      _
    // Predicated region
    $region26: #{tpu_custom_call.1} parent=1 // pred_check
      _
    $region27: #{tpu_custom_call.1} parent=1 // pred_check_branch
      %624 = sbr.rel (0) target = $region29
    $region28: #{tpu_custom_call.1} parent=1 // pred_region
      %625 = dma.done [#allocation4], 16
    $region29: #{tpu_custom_call.1} parent=1 // pred_fallthru
      _
    %626 = vsyncpa [#allocation4], 1

</llo_original>
